<compile_context>
chip_gen: v7x
topology: tpu7x:2x2x1
jax: 0.10.0
libtpu: 0.0.40
codegen_flags: <defaults>
</compile_context>

<pallas_src>
import jax
import jax.numpy as jnp
from jax import lax
from jax.experimental import pallas as pl
from jax.experimental.pallas import tpu as pltpu

BLOCK_SIZE = 128     # causal-mask buffer size in the PyTorch module
N_EMBD = 128         # n_embd
HEAD_SIZE = 32       # head_size (__init__ arg; chosen small)


def _head_kernel(x_ref, w_ref, o_ref):
    # x_ref: (B_blk, T, C)   w_ref: (C, 3H) bf16 (scale folded into Wq cols)
    # o_ref: (B_blk, T*H)    (lane-dense output block)
    Bb, T, C = x_ref.shape
    H3 = w_ref.shape[1]
    H = H3 // 3

    # ---- fused (scaled-)Q/K/V projection: one (Bb*T, C) @ (C, 3H) MXU matmul.
    x2 = x_ref[...].reshape(Bb * T, C).astype(jnp.bfloat16)
    w = w_ref[...]                                                  # bf16 already
    qkv = jnp.dot(x2, w, preferred_element_type=jnp.float32)       # (Bb*T, 3H) f32
    qkv = qkv.reshape(Bb, T, H3)

    # ---- split q / k / v from the in-register value (no VMEM round-trip).
    q = qkv[:, :, 0:H].astype(jnp.bfloat16)                         # already scaled
    k = qkv[:, :, H:2 * H].astype(jnp.bfloat16)
    v = qkv[:, :, 2 * H:H3].astype(jnp.bfloat16)

    # ---- scores: batched q @ k^T, bf16 operands, f32 accumulation.
    wei = jnp.einsum("bth,bsh->bts", q, k,
                     preferred_element_type=jnp.float32)            # (Bb, T, T)

    # ---- causal mask, built once per grid step, broadcast over the batch block.
    row = lax.broadcasted_iota(jnp.int32, (T, T), 0)
    col = lax.broadcasted_iota(jnp.int32, (T, T), 1)
    wei = jnp.where((col <= row)[None, :, :], wei, jnp.float32(-1e30))

    # ---- softmax over keys (all elementwise math in f32, EUP reciprocal).
    m = jnp.max(wei, axis=-1, keepdims=True)
    e = jnp.exp(wei - m)
    denom = jnp.sum(e, axis=-1, keepdims=True)
    p = e * pl.reciprocal(denom, approx=True)

    # nn.Dropout(0.1) in eval mode == identity.

    # ---- out = p @ v (bf16 operands, f32 accumulation), lane-dense store.
    out = jnp.einsum("bts,bsh->bth", p.astype(jnp.bfloat16), v,
                     preferred_element_type=jnp.float32)            # (Bb, T, H)
    o_ref[...] = out.reshape(Bb, T * H).astype(o_ref.dtype)


def _pick_b_blk(B, T, target_rows=512, min_steps=1):
    """Largest divisor d of B with d*T <= target_rows MXU rows per grid step.
    d must be a multiple of 8 (or equal B) so the (d, T*H) output tile obeys
    the (8, 128) layout constraint.  Set min_steps=2 on v7x (2 TensorCores);
    v5e/v6e have a single TC so min_steps=1 (fewer, larger steps win)."""
    best = None
    for d in range(1, B + 1):
        if B % d:
            continue
        if d * T > max(target_rows, T):
            continue
        if (B // d) < min_steps:
            continue
        if d % 8 != 0 and d != B:
            continue
        best = d
    if best is None:
        best = B   # full-array block always satisfies the tiling constraint
    return best


def head_forward(x, w_qkv, *, b_blk=None, min_steps=1, out_dtype=None):
    """x: (B, T, C) (bf16 preferred); w_qkv: (C, 3H) bf16 from fuse_qkv_weights."""
    B, T, C = x.shape
    H3 = w_qkv.shape[1]
    H = H3 // 3
    assert T <= BLOCK_SIZE and C == N_EMBD and H3 == 3 * H

    if b_blk is None:
        b_blk = _pick_b_blk(B, T, min_steps=min_steps)
    assert B % b_blk == 0
    grid = (B // b_blk,)

    if out_dtype is None:
        out_dtype = x.dtype

    flops = 2 * B * T * (C * H3 + T * H + T * H)
    bytes_accessed = (x.size * x.dtype.itemsize
                      + w_qkv.size * w_qkv.dtype.itemsize
                      + B * T * H * jnp.dtype(out_dtype).itemsize)
    cost = pl.CostEstimate(flops=int(flops),
                           transcendentals=int(B * T * T + B * T),
                           bytes_accessed=int(bytes_accessed))

    out2d = pl.pallas_call(
        _head_kernel,
        out_shape=jax.ShapeDtypeStruct((B, T * H), out_dtype),
        grid_spec=pltpu.PrefetchScalarGridSpec(
            num_scalar_prefetch=0,
            grid=grid,
            in_specs=[
                pl.BlockSpec((b_blk, T, C), lambda i: (i, 0, 0)),
                pl.BlockSpec((C, H3), lambda i: (0, 0)),
            ],
            out_specs=pl.BlockSpec((b_blk, T * H), lambda i: (i, 0)),
        ),
        compiler_params=pltpu.CompilerParams(
            dimension_semantics=("parallel",)),
        cost_estimate=cost,
    )(x, w_qkv)
    return out2d.reshape(B, T, H)


def fuse_qkv_weights(wq_t, wk_t, wv_t):
    """Stack pre-transposed (C, H) Linear weights into a fused bf16 (C, 3H)
    array [Wq^T * C**-0.5 | Wk^T | Wv^T] (scale folded host-side, one-off)."""
    C = wq_t.shape[0]
    scale = jnp.float32(C) ** -0.5          # module scales by C**-0.5 (not H)
    w = jnp.concatenate([wq_t.astype(jnp.float32) * scale,
                         wk_t.astype(jnp.float32),
                         wv_t.astype(jnp.float32)], axis=1)
    return w.astype(jnp.bfloat16)


def _reference(x, wk_t, wq_t, wv_t):
    """Pure-JAX f32 reference mirroring the PyTorch forward (eval mode)."""
    B, T, C = x.shape
    k = x @ wk_t
    q = x @ wq_t
    v = x @ wv_t
    wei = jnp.einsum("bth,bsh->bts", q, k) * (C ** -0.5)
    mask = jnp.tril(jnp.ones((T, T), dtype=bool))
    wei = jnp.where(mask, wei, -jnp.inf)
    wei = jax.nn.softmax(wei, axis=-1)
    return wei @ v


if __name__ == "__main__":
    key = jax.random.PRNGKey(0)
    kx, k1, k2, k3 = jax.random.split(key, 4)

    B, T, C, H = 8, 8, N_EMBD, HEAD_SIZE
    x_f32 = jax.random.normal(kx, (B, T, C), dtype=jnp.float32)

    # Deterministic nn.Linear-style init: U(-1/sqrt(C), 1/sqrt(C)), stored as W^T (C, H)
    bound = 1.0 / (C ** 0.5)
    wq_t = jax.random.uniform(k1, (C, H), jnp.float32, -bound, bound)
    wk_t = jax.random.uniform(k2, (C, H), jnp.float32, -bound, bound)
    wv_t = jax.random.uniform(k3, (C, H), jnp.float32, -bound, bound)

    # bf16 activations at the boundary (producer would already emit bf16);
    # fused bf16 weight with the C**-0.5 scale folded into the Wq columns.
    x = x_f32.astype(jnp.bfloat16)
    w_qkv = fuse_qkv_weights(wq_t, wk_t, wv_t)

    out = head_forward(x, w_qkv)
    jax.block_until_ready(out)

    # f32 reference from the same bf16-rounded inputs (PyTorch Head, eval mode).
    ref = _reference(x.astype(jnp.float32),
                     wk_t.astype(jnp.bfloat16).astype(jnp.float32),
                     wq_t.astype(jnp.bfloat16).astype(jnp.float32),
                     wv_t.astype(jnp.bfloat16).astype(jnp.float32))

    assert out.shape == (B, T, H)
    out_f32 = out.astype(jnp.float32)
    max_err = float(jnp.max(jnp.abs(out_f32 - ref)))
    # bf16 MXU operands / bf16 output + approx reciprocal -> relaxed tolerance.
    assert jnp.allclose(out_f32, ref, atol=5e-2, rtol=5e-2), f"max abs err {max_err}"

    print("KERNEL_OK")
</pallas_src>

<mosaic_0001>
module attributes {stable_mosaic.version = 11 : i64} {
  func.func @_head_kernel(%arg0: i32, %arg1: memref<8x8x128xbf16, #tpu.memory_space<vmem>>, %arg2: memref<128x96xbf16, #tpu.memory_space<vmem>>, %arg3: memref<8x256xbf16, #tpu.memory_space<vmem>>) attributes {dimension_semantics = [#tpu.dimension_semantics<parallel>], iteration_bounds = array<i64: 1>, scalar_prefetch = 0 : i64, scratch_operands = 0 : i64, tpu.core_type = #tpu.core_type<tc>, window_params = [{transform_indices = @transform_0, window_bounds = array<i64: 8, 8, 128>}, {pipeline_mode = #tpu.pipeline_mode<synchronous>, transform_indices = @transform_1, window_bounds = array<i64: 128, 96>}, {transform_indices = @transform_2, window_bounds = array<i64: 8, 256>}]} {
    %c0 = arith.constant 0 : index
    %c0_0 = arith.constant 0 : index
    %c0_1 = arith.constant 0 : index
    %0 = vector.load %arg1[%c0, %c0_0, %c0_1] : memref<8x8x128xbf16, #tpu.memory_space<vmem>>, vector<8x8x128xbf16>
    %1 = vector.shape_cast %0 : vector<8x8x128xbf16> to vector<64x128xbf16>
    %c0_2 = arith.constant 0 : index
    %c0_3 = arith.constant 0 : index
    %2 = vector.load %arg2[%c0_2, %c0_3] : memref<128x96xbf16, #tpu.memory_space<vmem>>, vector<128x96xbf16>
    %cst = arith.constant dense<0.000000e+00> : vector<64x96xf32>
    %3 = tpu.matmul %1, %2, %cst {dimension_numbers = #tpu.dot_dimension_numbers<[1], [0], [0], [1], [0, 0, 1, 1], [], []>} : vector<64x128xbf16>, vector<128x96xbf16>, vector<64x96xf32> -> vector<64x96xf32>
    %4 = vector.shape_cast %3 : vector<64x96xf32> to vector<8x8x96xf32>
    %5 = vector.extract_strided_slice %4 {offsets = [0, 0, 0], sizes = [8, 8, 32], strides = [1, 1, 1]} : vector<8x8x96xf32> to vector<8x8x32xf32>
    %6 = arith.truncf %5 : vector<8x8x32xf32> to vector<8x8x32xbf16>
    %7 = vector.extract_strided_slice %4 {offsets = [0, 0, 32], sizes = [8, 8, 32], strides = [1, 1, 1]} : vector<8x8x96xf32> to vector<8x8x32xf32>
    %8 = arith.truncf %7 : vector<8x8x32xf32> to vector<8x8x32xbf16>
    %9 = vector.extract_strided_slice %4 {offsets = [0, 0, 64], sizes = [8, 8, 32], strides = [1, 1, 1]} : vector<8x8x96xf32> to vector<8x8x32xf32>
    %10 = arith.truncf %9 : vector<8x8x32xf32> to vector<8x8x32xbf16>
    "tpu.trace_start"() <{level = 10 : i32, message = "bth,bsh->bts"}> : () -> ()
    %cst_4 = arith.constant dense<0.000000e+00> : vector<8x8x8xf32>
    %11 = tpu.matmul %6, %8, %cst_4 {dimension_numbers = #tpu.dot_dimension_numbers<[2], [2], [1], [1], [0, 0, 0, 1, 1, 1], [0], [0]>} : vector<8x8x32xbf16>, vector<8x8x32xbf16>, vector<8x8x8xf32> -> vector<8x8x8xf32>
    "tpu.trace_stop"() : () -> ()
    %12 = tpu.iota {dimensions = array<i32: 0>} : vector<8x8xi32>
    %13 = tpu.iota {dimensions = array<i32: 1>} : vector<8x8xi32>
    %14 = arith.cmpi sle, %13, %12 : vector<8x8xi32>
    %15 = vector.shape_cast %14 : vector<8x8xi1> to vector<1x8x8xi1>
    %cst_5 = arith.constant -1.000000e+30 : f32
    %16 = vector.shape_cast %15 : vector<1x8x8xi1> to vector<1x8x8xi1>
    %17 = vector.broadcast %16 : vector<1x8x8xi1> to vector<8x8x8xi1>
    %18 = vector.broadcast %cst_5 : f32 to vector<8x8x8xf32>
    %19 = arith.select %17, %11, %18 : vector<8x8x8xi1>, vector<8x8x8xf32>
    %cst_6 = arith.constant dense<0xFF800000> : vector<8x8xf32>
    %20 = vector.multi_reduction <maximumf>, %19, %cst_6 [2] : vector<8x8x8xf32> to vector<8x8xf32>
    %21 = vector.shape_cast %20 : vector<8x8xf32> to vector<8x8x1xf32>
    %22 = vector.broadcast %21 : vector<8x8x1xf32> to vector<8x8x8xf32>
    %23 = arith.subf %19, %22 : vector<8x8x8xf32>
    %24 = math.exp %23 : vector<8x8x8xf32>
    %cst_7 = arith.constant dense<0.000000e+00> : vector<8x8xf32>
    %25 = vector.multi_reduction <add>, %24, %cst_7 [2] : vector<8x8x8xf32> to vector<8x8xf32>
    %26 = vector.shape_cast %25 : vector<8x8xf32> to vector<8x8x1xf32>
    %27 = tpu.reciprocal %26 {approx = true} : vector<8x8x1xf32> -> vector<8x8x1xf32>
    %28 = vector.broadcast %27 : vector<8x8x1xf32> to vector<8x8x8xf32>
    %29 = arith.mulf %24, %28 : vector<8x8x8xf32>
    %30 = arith.truncf %29 : vector<8x8x8xf32> to vector<8x8x8xbf16>
    "tpu.trace_start"() <{level = 10 : i32, message = "bts,bsh->bth"}> : () -> ()
    %cst_8 = arith.constant dense<0.000000e+00> : vector<8x8x32xf32>
    %31 = tpu.matmul %30, %10, %cst_8 {dimension_numbers = #tpu.dot_dimension_numbers<[2], [1], [1], [2], [0, 0, 0, 1, 1, 2], [0], [0]>} : vector<8x8x8xbf16>, vector<8x8x32xbf16>, vector<8x8x32xf32> -> vector<8x8x32xf32>
    "tpu.trace_stop"() : () -> ()
    %32 = vector.shape_cast %31 : vector<8x8x32xf32> to vector<8x256xf32>
    %33 = arith.truncf %32 : vector<8x256xf32> to vector<8x256xbf16>
    %c0_9 = arith.constant 0 : index
    %c0_10 = arith.constant 0 : index
    %34 = vector.load %arg3[%c0_9, %c0_10] : memref<8x256xbf16, #tpu.memory_space<vmem>>, vector<8x256xbf16>
    tpu.vector_store %arg3[%c0_9, %c0_10], %33 {strides = array<i32>} : memref<8x256xbf16, #tpu.memory_space<vmem>>, vector<8x256xbf16>,
    return
  }
  func.func @transform_0(%arg0: i32) -> (i32, i32, i32) {
    %c0_i32 = arith.constant 0 : i32
    %c0_i32_0 = arith.constant 0 : i32
    %c0_i32_1 = arith.constant 0 : i32
    return %arg0, %c0_i32, %c0_i32_0 : i32, i32, i32
  }
  func.func @transform_1(%arg0: i32) -> (i32, i32) {
    %c0_i32 = arith.constant 0 : i32
    %c0_i32_0 = arith.constant 0 : i32
    %c0_i32_1 = arith.constant 0 : i32
    return %c0_i32, %c0_i32_0 : i32, i32
  }
  func.func @transform_2(%arg0: i32) -> (i32, i32) {
    %c0_i32 = arith.constant 0 : i32
    %c0_i32_0 = arith.constant 0 : i32
    return %arg0, %c0_i32 : i32, i32
  }
}

</mosaic_0001>

<llo_original>
// kernel: tpu_custom_call.1
$region0: #{tpu_custom_call.1}
  #allocation0 [shape = 'u32[]', space=smem, size = 0x4, offset = 0x4, fixed_abs, tag = 'smem constant byte address 0x4 - core index']
  #allocation1 [shape = 'u32[144,128]{1,0:T(1,128)}', space=vmem, size = 0x12000, scoped, tag = 'internal scratch']
  %s0 = inlined_call_operand.vmem [shape: bf16[8,8,128], index: 0, kind: input, shape index: {}]
  %s1 = inlined_call_operand.vmem [shape: bf16[128,96], index: 1, kind: input, shape index: {}]
  %s2 = inlined_call_operand.hbm [shape: bf16[8,256], index: 2, kind: output, shape index: {}]
  %s3 = sld [smem:[#allocation0]]
  $region18: #{tpu_custom_call.1} parent=0
    _
  %s5 = ssub.s32 1, %s3
  %s6 = scalar_select 0, %s5, %s3
  $region1: #{tpu_custom_call.1} parent=0
    #allocation2 [shape = 'u8[4096]{0}', space=vmem, size = 0x1000, scoped, tag = 'output window, operand 0, single buffered']
    #allocation3 [shape = 's32[1]{0}', space=sflag, size = 0x4, scoped, tag = 'scoped memory for tpu_custom_call.1']
    %7 = vsyncpa [#allocation3], 0
    // Predicated region
    $region2: #{tpu_custom_call.1} parent=1 // pred_check
      _
    $region3: #{tpu_custom_call.1} parent=1 // pred_check_branch
      %9 = sbr.rel (0) target = $region5
    $region4: #{tpu_custom_call.1} parent=1 // pred_region
      _
    $region5: #{tpu_custom_call.1} parent=1 // pred_fallthru
      _
    // Predicated region
    $region6: #{tpu_custom_call.1} parent=1 // pred_check
      _
    $region7: #{tpu_custom_call.1} parent=1 // pred_check_branch
      %11 = sbr.rel (0) target = $region9
    $region8: #{tpu_custom_call.1} parent=1 // pred_region
      _
    $region9: #{tpu_custom_call.1} parent=1 // pred_fallthru
      _
    %v13 = vld [vmem:[%s0] sm:$0xf]
    %v14 = vld [vmem:[%s0 + $0x4] sm:$0xf]
    %v15 = vld [vmem:[%s0 + $0x8] sm:$0xf]
    %v16 = vld [vmem:[%s0 + $0xc] sm:$0xf]
    %v17 = vld [vmem:[%s0 + $0x10] sm:$0xf]
    %v18 = vld [vmem:[%s0 + $0x14] sm:$0xf]
    %v19 = vld [vmem:[%s0 + $0x18] sm:$0xf]
    %v20 = vld [vmem:[%s0 + $0x1c] sm:$0xf]
    %v21 = vld [vmem:[%s1] sm:$0xf]
    %v22 = vld [vmem:[%s1 + $0x4] sm:$0xf]
    %v23 = vld [vmem:[%s1 + $0x8] sm:$0xf]
    %v24 = vld [vmem:[%s1 + $0xc] sm:$0xf]
    %v25 = vld [vmem:[%s1 + $0x10] sm:$0xf]
    %v26 = vld [vmem:[%s1 + $0x14] sm:$0xf]
    %v27 = vld [vmem:[%s1 + $0x18] sm:$0xf]
    %v28 = vld [vmem:[%s1 + $0x1c] sm:$0xf]
    %v29 = vld [vmem:[%s1 + $0x20] sm:$0xf]
    %v30 = vld [vmem:[%s1 + $0x24] sm:$0xf]
    %v31 = vld [vmem:[%s1 + $0x28] sm:$0xf]
    %v32 = vld [vmem:[%s1 + $0x2c] sm:$0xf]
    %v33 = vld [vmem:[%s1 + $0x30] sm:$0xf]
    %v34 = vld [vmem:[%s1 + $0x34] sm:$0xf]
    %v35 = vld [vmem:[%s1 + $0x38] sm:$0xf]
    %v36 = vld [vmem:[%s1 + $0x3c] sm:$0xf]
    %v45 = vunpack.c.l.b16 %v13
    %v46 = vunpack.c.l.b16 %v14
    %v47 = vunpack.c.l.b16 %v15
    %v48 = vunpack.c.l.b16 %v16
    %v49 = vunpack.c.l.b16 %v17
    %v50 = vunpack.c.l.b16 %v18
    %v51 = vunpack.c.l.b16 %v19
    %v52 = vunpack.c.l.b16 %v20
    %v53 = vpack.c.b16 %v46, %v45
    %v54 = vpack.c.b16 %v48, %v47
    %v55 = vpack.c.b16 %v50, %v49
    %v56 = vpack.c.b16 %v52, %v51
    %v77 = vunpack.c.l.b16 %v21
    %v78 = vunpack.c.l.b16 %v22
    %v79 = vunpack.c.l.b16 %v23
    %v80 = vunpack.c.l.b16 %v24
    %v81 = vunpack.c.l.b16 %v25
    %v82 = vunpack.c.l.b16 %v26
    %v83 = vunpack.c.l.b16 %v27
    %v84 = vunpack.c.l.b16 %v28
    %v85 = vunpack.c.l.b16 %v29
    %v86 = vunpack.c.l.b16 %v30
    %v87 = vunpack.c.l.b16 %v31
    %v88 = vunpack.c.l.b16 %v32
    %v89 = vunpack.c.l.b16 %v33
    %v90 = vunpack.c.l.b16 %v34
    %v91 = vunpack.c.l.b16 %v35
    %v92 = vunpack.c.l.b16 %v36
    %v93 = vpack.c.b16 %v78, %v77
    %v94 = vpack.c.b16 %v80, %v79
    %v95 = vpack.c.b16 %v82, %v81
    %v96 = vpack.c.b16 %v84, %v83
    %v97 = vpack.c.b16 %v86, %v85
    %v98 = vpack.c.b16 %v88, %v87
    %v99 = vpack.c.b16 %v90, %v89
    %v100 = vpack.c.b16 %v92, %v91
    %109 = vmatprep.subr.bf16.mxu0 0
    %110 = vmatpush1.bf16.msra.mxu0 %v93
    %111 = vmatprep.subr.bf16.mxu0 0
    %112 = vmatpush1.bf16.msra.mxu0 %v94
    %113 = vmatprep.subr.bf16.mxu0 0
    %114 = vmatpush1.bf16.msra.mxu0 %v95
    %115 = vmatprep.subr.bf16.mxu0 0
    %116 = vmatpush1.bf16.msra.mxu0 %v96
    %117 = vmatprep.subr.bf16.mxu0 0
    %118 = vmatpush1.bf16.msra.mxu0 %v97
    %119 = vmatprep.subr.bf16.mxu0 0
    %120 = vmatpush1.bf16.msra.mxu0 %v98
    %121 = vmatprep.subr.bf16.mxu0 0
    %122 = vmatpush1.bf16.msra.mxu0 %v99
    %123 = vmatprep.subr.bf16.mxu0 0
    %124 = vmatpush1.bf16.msra.mxu0 %v100
    %125 = vmatprep.subr.bf16.mxu0 0
    %126 = vmatpush1.bf16.msra.mxu0 0
    %127 = vmatprep.subr.bf16.mxu0 0
    %128 = vmatpush1.bf16.msra.mxu0 0
    %129 = vmatprep.subr.bf16.mxu0 0
    %130 = vmatpush1.bf16.msra.mxu0 0
    %131 = vmatprep.subr.bf16.mxu0 0
    %132 = vmatpush1.bf16.msra.mxu0 0
    %133 = vmatprep.subr.bf16.mxu0 0
    %134 = vmatpush1.bf16.msra.mxu0 0
    %135 = vmatprep.subr.bf16.mxu0 0
    %136 = vmatpush1.bf16.msra.mxu0 0
    %137 = vmatprep.subr.bf16.mxu0 0
    %138 = vmatpush1.bf16.msra.mxu0 0
    %139 = vmatprep.subr.bf16.mxu0 0
    %140 = vmatpush1.bf16.msra.mxu0 0
    %141 = vmatprep.mubr.bf16.mxu0 0
    %142 = vmatmul.mubr.bf16.gmra.mrb[0].mxu0 %v53
    %v143 = vpop.f32.mrb[0].mxu0
    %v144 = vadd.f32 0.0, %v143
    %v145 = vpop.f32.mrb[0].mxu0
    %v146 = vpop.f32.mrb[0].mxu0
    %v147 = vadd.f32 0.0, %v146
    %v148 = vpop.f32.mrb[0].mxu0
    %149 = vmatprep.mubr.bf16.mxu0 0
    %150 = vmatmul.mubr.bf16.gmra.mrb[0].mxu0 %v54
    %v151 = vpop.f32.mrb[0].mxu0
    %v152 = vadd.f32 0.0, %v151
    %v153 = vpop.f32.mrb[0].mxu0
    %v154 = vpop.f32.mrb[0].mxu0
    %v155 = vadd.f32 0.0, %v154
    %v156 = vpop.f32.mrb[0].mxu0
    %157 = vmatprep.mubr.bf16.mxu0 0
    %158 = vmatmul.mubr.bf16.gmra.mrb[0].mxu0 %v55
    %v159 = vpop.f32.mrb[0].mxu0
    %v160 = vadd.f32 0.0, %v159
    %v161 = vpop.f32.mrb[0].mxu0
    %v162 = vpop.f32.mrb[0].mxu0
    %v163 = vadd.f32 0.0, %v162
    %v164 = vpop.f32.mrb[0].mxu0
    %165 = vmatprep.mubr.bf16.mxu0 0
    %166 = vmatmul.mubr.bf16.gmra.mrb[0].mxu0 %v56
    %v167 = vpop.f32.mrb[0].mxu0
    %v168 = vadd.f32 0.0, %v167
    %v169 = vpop.f32.mrb[0].mxu0
    %v170 = vpop.f32.mrb[0].mxu0
    %v171 = vadd.f32 0.0, %v170
    %v172 = vpop.f32.mrb[0].mxu0
    %173 = vdwg.mxu0
    %v174 = vpack.c.bf16 %v144, %v144
    %v175 = vpack.c.bf16 %v147, %v147
    %v176 = vpack.c.bf16 %v152, %v152
    %v177 = vpack.c.bf16 %v155, %v155
    %v178 = vpack.c.bf16 %v160, %v160
    %v179 = vpack.c.bf16 %v163, %v163
    %v180 = vpack.c.bf16 %v168, %v168
    %v181 = vpack.c.bf16 %v171, %v171
    %183 = vrot.lane.b32.xlu0 %v174, 96
    %v184 = vpop.permute.xlu0 %183
    %vm185 = vcmask 261120
    %v187 = vsel %vm185, %v174, 0
    %v190 = vsel %vm185, %v184, 0
    %192 = vmatprep.subr.bf16.mxu0 0
    %193 = vmatpush1.bf16.xpose.msra.mxu0 %v190
    %194 = vmatprep.subr.bf16.mxu0 0
    %195 = vmatpush1.bf16.xpose.msra.mxu0 0
    %196 = vmatprep.subr.bf16.mxu0 0
    %197 = vmatpush1.bf16.xpose.msra.mxu0 0
    %198 = vmatprep.subr.bf16.mxu0 0
    %199 = vmatpush1.bf16.xpose.msra.mxu0 0
    %200 = vmatprep.subr.bf16.mxu0 0
    %201 = vmatpush1.bf16.xpose.msra.mxu0 0
    %202 = vmatprep.subr.bf16.mxu0 0
    %203 = vmatpush1.bf16.xpose.msra.mxu0 0
    %204 = vmatprep.subr.bf16.mxu0 0
    %205 = vmatpush1.bf16.xpose.msra.mxu0 0
    %206 = vmatprep.subr.bf16.mxu0 0
    %207 = vmatpush1.bf16.xpose.msra.mxu0 0
    %208 = vmatprep.subr.bf16.mxu0 0
    %209 = vmatpush1.bf16.xpose.msra.mxu0 0
    %210 = vmatprep.subr.bf16.mxu0 0
    %211 = vmatpush1.bf16.xpose.msra.mxu0 0
    %212 = vmatprep.subr.bf16.mxu0 0
    %213 = vmatpush1.bf16.xpose.msra.mxu0 0
    %214 = vmatprep.subr.bf16.mxu0 0
    %215 = vmatpush1.bf16.xpose.msra.mxu0 0
    %216 = vmatprep.subr.bf16.mxu0 0
    %217 = vmatpush1.bf16.xpose.msra.mxu0 0
    %218 = vmatprep.subr.bf16.mxu0 0
    %219 = vmatpush1.bf16.xpose.msra.mxu0 0
    %220 = vmatprep.subr.bf16.mxu0 0
    %221 = vmatpush1.bf16.xpose.msra.mxu0 0
    %222 = vmatprep.subr.bf16.mxu0 0
    %223 = vmatpush1.bf16.xpose.msra.mxu0 0
    %224 = vmatprep.mubr.bf16.mxu0 0
    %225 = vmatmul.mubr.bf16.gmra.mrb[0].mxu0 %v187
    %v226 = vpop.f32.mrb[0].mxu0
    %v227 = vadd.f32 0.0, %v226
    %v228 = vpop.f32.mrb[0].mxu0
    %v229 = vpop.f32.mrb[0].mxu0
    %v230 = vpop.f32.mrb[0].mxu0
    %231 = vdwg.mxu0
    %233 = vrot.lane.b32.xlu0 %v175, 96
    %v234 = vpop.permute.xlu0 %233
    %v236 = vsel %vm185, %v175, 0
    %v239 = vsel %vm185, %v234, 0
    %241 = vmatprep.subr.bf16.mxu0 0
    %242 = vmatpush1.bf16.xpose.msra.mxu0 %v239
    %243 = vmatprep.subr.bf16.mxu0 0
    %244 = vmatpush1.bf16.xpose.msra.mxu0 0
    %245 = vmatprep.subr.bf16.mxu0 0
    %246 = vmatpush1.bf16.xpose.msra.mxu0 0
    %247 = vmatprep.subr.bf16.mxu0 0
    %248 = vmatpush1.bf16.xpose.msra.mxu0 0
    %249 = vmatprep.subr.bf16.mxu0 0
    %250 = vmatpush1.bf16.xpose.msra.mxu0 0
    %251 = vmatprep.subr.bf16.mxu0 0
    %252 = vmatpush1.bf16.xpose.msra.mxu0 0
    %253 = vmatprep.subr.bf16.mxu0 0
    %254 = vmatpush1.bf16.xpose.msra.mxu0 0
    %255 = vmatprep.subr.bf16.mxu0 0
    %256 = vmatpush1.bf16.xpose.msra.mxu0 0
    %257 = vmatprep.subr.bf16.mxu0 0
    %258 = vmatpush1.bf16.xpose.msra.mxu0 0
    %259 = vmatprep.subr.bf16.mxu0 0
    %260 = vmatpush1.bf16.xpose.msra.mxu0 0
    %261 = vmatprep.subr.bf16.mxu0 0
    %262 = vmatpush1.bf16.xpose.msra.mxu0 0
    %263 = vmatprep.subr.bf16.mxu0 0
    %264 = vmatpush1.bf16.xpose.msra.mxu0 0
    %265 = vmatprep.subr.bf16.mxu0 0
    %266 = vmatpush1.bf16.xpose.msra.mxu0 0
    %267 = vmatprep.subr.bf16.mxu0 0
    %268 = vmatpush1.bf16.xpose.msra.mxu0 0
    %269 = vmatprep.subr.bf16.mxu0 0
    %270 = vmatpush1.bf16.xpose.msra.mxu0 0
    %271 = vmatprep.subr.bf16.mxu0 0
    %272 = vmatpush1.bf16.xpose.msra.mxu0 0
    %273 = vmatprep.mubr.bf16.mxu0 0
    %274 = vmatmul.mubr.bf16.gmra.mrb[0].mxu0 %v236
    %v275 = vpop.f32.mrb[0].mxu0
    %v276 = vadd.f32 0.0, %v275
    %v277 = vpop.f32.mrb[0].mxu0
    %v278 = vpop.f32.mrb[0].mxu0
    %v279 = vpop.f32.mrb[0].mxu0
    %280 = vdwg.mxu0
    %282 = vrot.lane.b32.xlu0 %v176, 96
    %v283 = vpop.permute.xlu0 %282
    %v285 = vsel %vm185, %v176, 0
    %v288 = vsel %vm185, %v283, 0
    %290 = vmatprep.subr.bf16.mxu0 0
    %291 = vmatpush1.bf16.xpose.msra.mxu0 %v288
    %292 = vmatprep.subr.bf16.mxu0 0
    %293 = vmatpush1.bf16.xpose.msra.mxu0 0
    %294 = vmatprep.subr.bf16.mxu0 0
    %295 = vmatpush1.bf16.xpose.msra.mxu0 0
    %296 = vmatprep.subr.bf16.mxu0 0
    %297 = vmatpush1.bf16.xpose.msra.mxu0 0
    %298 = vmatprep.subr.bf16.mxu0 0
    %299 = vmatpush1.bf16.xpose.msra.mxu0 0
    %300 = vmatprep.subr.bf16.mxu0 0
    %301 = vmatpush1.bf16.xpose.msra.mxu0 0
    %302 = vmatprep.subr.bf16.mxu0 0
    %303 = vmatpush1.bf16.xpose.msra.mxu0 0
    %304 = vmatprep.subr.bf16.mxu0 0
    %305 = vmatpush1.bf16.xpose.msra.mxu0 0
    %306 = vmatprep.subr.bf16.mxu0 0
    %307 = vmatpush1.bf16.xpose.msra.mxu0 0
    %308 = vmatprep.subr.bf16.mxu0 0
    %309 = vmatpush1.bf16.xpose.msra.mxu0 0
    %310 = vmatprep.subr.bf16.mxu0 0
    %311 = vmatpush1.bf16.xpose.msra.mxu0 0
    %312 = vmatprep.subr.bf16.mxu0 0
    %313 = vmatpush1.bf16.xpose.msra.mxu0 0
    %314 = vmatprep.subr.bf16.mxu0 0
    %315 = vmatpush1.bf16.xpose.msra.mxu0 0
    %316 = vmatprep.subr.bf16.mxu0 0
    %317 = vmatpush1.bf16.xpose.msra.mxu0 0
    %318 = vmatprep.subr.bf16.mxu0 0
    %319 = vmatpush1.bf16.xpose.msra.mxu0 0
    %320 = vmatprep.subr.bf16.mxu0 0
    %321 = vmatpush1.bf16.xpose.msra.mxu0 0
    %322 = vmatprep.mubr.bf16.mxu0 0
    %323 = vmatmul.mubr.bf16.gmra.mrb[0].mxu0 %v285
    %v324 = vpop.f32.mrb[0].mxu0
    %v325 = vadd.f32 0.0, %v324
    %v326 = vpop.f32.mrb[0].mxu0
    %v327 = vpop.f32.mrb[0].mxu0
    %v328 = vpop.f32.mrb[0].mxu0
    %329 = vdwg.mxu0
    %331 = vrot.lane.b32.xlu0 %v177, 96
    %v332 = vpop.permute.xlu0 %331
    %v334 = vsel %vm185, %v177, 0
    %v337 = vsel %vm185, %v332, 0
    %339 = vmatprep.subr.bf16.mxu0 0
    %340 = vmatpush1.bf16.xpose.msra.mxu0 %v337
    %341 = vmatprep.subr.bf16.mxu0 0
    %342 = vmatpush1.bf16.xpose.msra.mxu0 0
    %343 = vmatprep.subr.bf16.mxu0 0
    %344 = vmatpush1.bf16.xpose.msra.mxu0 0
    %345 = vmatprep.subr.bf16.mxu0 0
    %346 = vmatpush1.bf16.xpose.msra.mxu0 0
    %347 = vmatprep.subr.bf16.mxu0 0
    %348 = vmatpush1.bf16.xpose.msra.mxu0 0
    %349 = vmatprep.subr.bf16.mxu0 0
    %350 = vmatpush1.bf16.xpose.msra.mxu0 0
    %351 = vmatprep.subr.bf16.mxu0 0
    %352 = vmatpush1.bf16.xpose.msra.mxu0 0
    %353 = vmatprep.subr.bf16.mxu0 0
    %354 = vmatpush1.bf16.xpose.msra.mxu0 0
    %355 = vmatprep.subr.bf16.mxu0 0
    %356 = vmatpush1.bf16.xpose.msra.mxu0 0
    %357 = vmatprep.subr.bf16.mxu0 0
    %358 = vmatpush1.bf16.xpose.msra.mxu0 0
    %359 = vmatprep.subr.bf16.mxu0 0
    %360 = vmatpush1.bf16.xpose.msra.mxu0 0
    %361 = vmatprep.subr.bf16.mxu0 0
    %362 = vmatpush1.bf16.xpose.msra.mxu0 0
    %363 = vmatprep.subr.bf16.mxu0 0
    %364 = vmatpush1.bf16.xpose.msra.mxu0 0
    %365 = vmatprep.subr.bf16.mxu0 0
    %366 = vmatpush1.bf16.xpose.msra.mxu0 0
    %367 = vmatprep.subr.bf16.mxu0 0
    %368 = vmatpush1.bf16.xpose.msra.mxu0 0
    %369 = vmatprep.subr.bf16.mxu0 0
    %370 = vmatpush1.bf16.xpose.msra.mxu0 0
    %371 = vmatprep.mubr.bf16.mxu0 0
    %372 = vmatmul.mubr.bf16.gmra.mrb[0].mxu0 %v334
    %v373 = vpop.f32.mrb[0].mxu0
    %v374 = vadd.f32 0.0, %v373
    %v375 = vpop.f32.mrb[0].mxu0
    %v376 = vpop.f32.mrb[0].mxu0
    %v377 = vpop.f32.mrb[0].mxu0
    %378 = vdwg.mxu0
    %380 = vrot.lane.b32.xlu0 %v178, 96
    %v381 = vpop.permute.xlu0 %380
    %v383 = vsel %vm185, %v178, 0
    %v386 = vsel %vm185, %v381, 0
    %388 = vmatprep.subr.bf16.mxu0 0
    %389 = vmatpush1.bf16.xpose.msra.mxu0 %v386
    %390 = vmatprep.subr.bf16.mxu0 0
    %391 = vmatpush1.bf16.xpose.msra.mxu0 0
    %392 = vmatprep.subr.bf16.mxu0 0
    %393 = vmatpush1.bf16.xpose.msra.mxu0 0
    %394 = vmatprep.subr.bf16.mxu0 0
    %395 = vmatpush1.bf16.xpose.msra.mxu0 0
    %396 = vmatprep.subr.bf16.mxu0 0
    %397 = vmatpush1.bf16.xpose.msra.mxu0 0
    %398 = vmatprep.subr.bf16.mxu0 0
    %399 = vmatpush1.bf16.xpose.msra.mxu0 0
    %400 = vmatprep.subr.bf16.mxu0 0
    %401 = vmatpush1.bf16.xpose.msra.mxu0 0
    %402 = vmatprep.subr.bf16.mxu0 0
    %403 = vmatpush1.bf16.xpose.msra.mxu0 0
    %404 = vmatprep.subr.bf16.mxu0 0
    %405 = vmatpush1.bf16.xpose.msra.mxu0 0
    %406 = vmatprep.subr.bf16.mxu0 0
    %407 = vmatpush1.bf16.xpose.msra.mxu0 0
    %408 = vmatprep.subr.bf16.mxu0 0
    %409 = vmatpush1.bf16.xpose.msra.mxu0 0
    %410 = vmatprep.subr.bf16.mxu0 0
    %411 = vmatpush1.bf16.xpose.msra.mxu0 0
    %412 = vmatprep.subr.bf16.mxu0 0
    %413 = vmatpush1.bf16.xpose.msra.mxu0 0
    %414 = vmatprep.subr.bf16.mxu0 0
    %415 = vmatpush1.bf16.xpose.msra.mxu0 0
    %416 = vmatprep.subr.bf16.mxu0 0
    %417 = vmatpush1.bf16.xpose.msra.mxu0 0
    %418 = vmatprep.subr.bf16.mxu0 0
    %419 = vmatpush1.bf16.xpose.msra.mxu0 0
    %420 = vmatprep.mubr.bf16.mxu0 0
    %421 = vmatmul.mubr.bf16.gmra.mrb[0].mxu0 %v383
    %v422 = vpop.f32.mrb[0].mxu0
    %v423 = vadd.f32 0.0, %v422
    %v424 = vpop.f32.mrb[0].mxu0
    %v425 = vpop.f32.mrb[0].mxu0
    %v426 = vpop.f32.mrb[0].mxu0
    %427 = vdwg.mxu0
    %429 = vrot.lane.b32.xlu0 %v179, 96
    %v430 = vpop.permute.xlu0 %429
    %v432 = vsel %vm185, %v179, 0
    %v435 = vsel %vm185, %v430, 0
    %437 = vmatprep.subr.bf16.mxu0 0
    %438 = vmatpush1.bf16.xpose.msra.mxu0 %v435
    %439 = vmatprep.subr.bf16.mxu0 0
    %440 = vmatpush1.bf16.xpose.msra.mxu0 0
    %441 = vmatprep.subr.bf16.mxu0 0
    %442 = vmatpush1.bf16.xpose.msra.mxu0 0
    %443 = vmatprep.subr.bf16.mxu0 0
    %444 = vmatpush1.bf16.xpose.msra.mxu0 0
    %445 = vmatprep.subr.bf16.mxu0 0
    %446 = vmatpush1.bf16.xpose.msra.mxu0 0
    %447 = vmatprep.subr.bf16.mxu0 0
    %448 = vmatpush1.bf16.xpose.msra.mxu0 0
    %449 = vmatprep.subr.bf16.mxu0 0
    %450 = vmatpush1.bf16.xpose.msra.mxu0 0
    %451 = vmatprep.subr.bf16.mxu0 0
    %452 = vmatpush1.bf16.xpose.msra.mxu0 0
    %453 = vmatprep.subr.bf16.mxu0 0
    %454 = vmatpush1.bf16.xpose.msra.mxu0 0
    %455 = vmatprep.subr.bf16.mxu0 0
    %456 = vmatpush1.bf16.xpose.msra.mxu0 0
    %457 = vmatprep.subr.bf16.mxu0 0
    %458 = vmatpush1.bf16.xpose.msra.mxu0 0
    %459 = vmatprep.subr.bf16.mxu0 0
    %460 = vmatpush1.bf16.xpose.msra.mxu0 0
    %461 = vmatprep.subr.bf16.mxu0 0
    %462 = vmatpush1.bf16.xpose.msra.mxu0 0
    %463 = vmatprep.subr.bf16.mxu0 0
    %464 = vmatpush1.bf16.xpose.msra.mxu0 0
    %465 = vmatprep.subr.bf16.mxu0 0
    %466 = vmatpush1.bf16.xpose.msra.mxu0 0
    %467 = vmatprep.subr.bf16.mxu0 0
    %468 = vmatpush1.bf16.xpose.msra.mxu0 0
    %469 = vmatprep.mubr.bf16.mxu0 0
    %470 = vmatmul.mubr.bf16.gmra.mrb[0].mxu0 %v432
    %v471 = vpop.f32.mrb[0].mxu0
    %v472 = vadd.f32 0.0, %v471
    %v473 = vpop.f32.mrb[0].mxu0
    %v474 = vpop.f32.mrb[0].mxu0
    %v475 = vpop.f32.mrb[0].mxu0
    %476 = vdwg.mxu0
    %478 = vrot.lane.b32.xlu0 %v180, 96
    %v479 = vpop.permute.xlu0 %478
    %v481 = vsel %vm185, %v180, 0
    %v484 = vsel %vm185, %v479, 0
    %486 = vmatprep.subr.bf16.mxu0 0
    %487 = vmatpush1.bf16.xpose.msra.mxu0 %v484
    %488 = vmatprep.subr.bf16.mxu0 0
    %489 = vmatpush1.bf16.xpose.msra.mxu0 0
    %490 = vmatprep.subr.bf16.mxu0 0
    %491 = vmatpush1.bf16.xpose.msra.mxu0 0
    %492 = vmatprep.subr.bf16.mxu0 0
    %493 = vmatpush1.bf16.xpose.msra.mxu0 0
    %494 = vmatprep.subr.bf16.mxu0 0
    %495 = vmatpush1.bf16.xpose.msra.mxu0 0
    %496 = vmatprep.subr.bf16.mxu0 0
    %497 = vmatpush1.bf16.xpose.msra.mxu0 0
    %498 = vmatprep.subr.bf16.mxu0 0
    %499 = vmatpush1.bf16.xpose.msra.mxu0 0
    %500 = vmatprep.subr.bf16.mxu0 0
    %501 = vmatpush1.bf16.xpose.msra.mxu0 0
    %502 = vmatprep.subr.bf16.mxu0 0
    %503 = vmatpush1.bf16.xpose.msra.mxu0 0
    %504 = vmatprep.subr.bf16.mxu0 0
    %505 = vmatpush1.bf16.xpose.msra.mxu0 0
    %506 = vmatprep.subr.bf16.mxu0 0
    %507 = vmatpush1.bf16.xpose.msra.mxu0 0
    %508 = vmatprep.subr.bf16.mxu0 0
    %509 = vmatpush1.bf16.xpose.msra.mxu0 0
    %510 = vmatprep.subr.bf16.mxu0 0
    %511 = vmatpush1.bf16.xpose.msra.mxu0 0
    %512 = vmatprep.subr.bf16.mxu0 0
    %513 = vmatpush1.bf16.xpose.msra.mxu0 0
    %514 = vmatprep.subr.bf16.mxu0 0
    %515 = vmatpush1.bf16.xpose.msra.mxu0 0
    %516 = vmatprep.subr.bf16.mxu0 0
    %517 = vmatpush1.bf16.xpose.msra.mxu0 0
    %518 = vmatprep.mubr.bf16.mxu0 0
    %519 = vmatmul.mubr.bf16.gmra.mrb[0].mxu0 %v481
    %v520 = vpop.f32.mrb[0].mxu0
    %v521 = vadd.f32 0.0, %v520
    %v522 = vpop.f32.mrb[0].mxu0
    %v523 = vpop.f32.mrb[0].mxu0
    %v524 = vpop.f32.mrb[0].mxu0
    %525 = vdwg.mxu0
    %527 = vrot.lane.b32.xlu0 %v181, 96
    %v528 = vpop.permute.xlu0 %527
    %v530 = vsel %vm185, %v181, 0
    %v533 = vsel %vm185, %v528, 0
    %535 = vmatprep.subr.bf16.mxu0 0
    %536 = vmatpush1.bf16.xpose.msra.mxu0 %v533
    %537 = vmatprep.subr.bf16.mxu0 0
    %538 = vmatpush1.bf16.xpose.msra.mxu0 0
    %539 = vmatprep.subr.bf16.mxu0 0
    %540 = vmatpush1.bf16.xpose.msra.mxu0 0
    %541 = vmatprep.subr.bf16.mxu0 0
    %542 = vmatpush1.bf16.xpose.msra.mxu0 0
    %543 = vmatprep.subr.bf16.mxu0 0
    %544 = vmatpush1.bf16.xpose.msra.mxu0 0
    %545 = vmatprep.subr.bf16.mxu0 0
    %546 = vmatpush1.bf16.xpose.msra.mxu0 0
    %547 = vmatprep.subr.bf16.mxu0 0
    %548 = vmatpush1.bf16.xpose.msra.mxu0 0
    %549 = vmatprep.subr.bf16.mxu0 0
    %550 = vmatpush1.bf16.xpose.msra.mxu0 0
    %551 = vmatprep.subr.bf16.mxu0 0
    %552 = vmatpush1.bf16.xpose.msra.mxu0 0
    %553 = vmatprep.subr.bf16.mxu0 0
    %554 = vmatpush1.bf16.xpose.msra.mxu0 0
    %555 = vmatprep.subr.bf16.mxu0 0
    %556 = vmatpush1.bf16.xpose.msra.mxu0 0
    %557 = vmatprep.subr.bf16.mxu0 0
    %558 = vmatpush1.bf16.xpose.msra.mxu0 0
    %559 = vmatprep.subr.bf16.mxu0 0
    %560 = vmatpush1.bf16.xpose.msra.mxu0 0
    %561 = vmatprep.subr.bf16.mxu0 0
    %562 = vmatpush1.bf16.xpose.msra.mxu0 0
    %563 = vmatprep.subr.bf16.mxu0 0
    %564 = vmatpush1.bf16.xpose.msra.mxu0 0
    %565 = vmatprep.subr.bf16.mxu0 0
    %566 = vmatpush1.bf16.xpose.msra.mxu0 0
    %567 = vmatprep.mubr.bf16.mxu0 0
    %568 = vmatmul.mubr.bf16.gmra.mrb[0].mxu0 %v530
    %v569 = vpop.f32.mrb[0].mxu0
    %v570 = vadd.f32 0.0, %v569
    %v571 = vpop.f32.mrb[0].mxu0
    %v572 = vpop.f32.mrb[0].mxu0
    %v573 = vpop.f32.mrb[0].mxu0
    %574 = vdwg.mxu0
    %v575 = vlaneseq
    %v576 = vshrl.u32 %v575, 7
    %v577 = vlaneseq
    %v578 = vand.u32 %v577, 127
    %vm579 = vcmp.le.s32.totalorder %v578, %v576
    %v580 = vsel %vm579, 1, 0
    %vm581 = vcmp.eq.s32.totalorder %v580, 1
    %v582 = vsel %vm581, %v227, -1e+30
    %v583 = vsel %vm581, %v276, -1e+30
    %v584 = vsel %vm581, %v325, -1e+30
    %v585 = vsel %vm581, %v374, -1e+30
    %v586 = vsel %vm581, %v423, -1e+30
    %v587 = vsel %vm581, %v472, -1e+30
    %v588 = vsel %vm581, %v521, -1e+30
    %v589 = vsel %vm581, %v570, -1e+30
    %vm590 = vcmask 64512
    %v591 = vsel %vm590, %v582, -inf
    %592 = vmax.xlane.f32.xlu0 %v591
    %v593 = vpop.xlane.xlu0 %592
    %v594 = vsel %vm590, %v583, -inf
    %595 = vmax.xlane.f32.xlu0 %v594
    %v596 = vpop.xlane.xlu0 %595
    %v597 = vsel %vm590, %v584, -inf
    %598 = vmax.xlane.f32.xlu0 %v597
    %v599 = vpop.xlane.xlu0 %598
    %v600 = vsel %vm590, %v585, -inf
    %601 = vmax.xlane.f32.xlu0 %v600
    %v602 = vpop.xlane.xlu0 %601
    %v603 = vsel %vm590, %v586, -inf
    %604 = vmax.xlane.f32.xlu0 %v603
    %v605 = vpop.xlane.xlu0 %604
    %v606 = vsel %vm590, %v587, -inf
    %607 = vmax.xlane.f32.xlu0 %v606
    %v608 = vpop.xlane.xlu0 %607
    %v609 = vsel %vm590, %v588, -inf
    %610 = vmax.xlane.f32.xlu0 %v609
    %v611 = vpop.xlane.xlu0 %610
    %v612 = vsel %vm590, %v589, -inf
    %613 = vmax.xlane.f32.xlu0 %v612
    %v614 = vpop.xlane.xlu0 %613
    %v615 = vsub.f32 %v582, %v593
    %v616 = vsub.f32 %v583, %v596
    %v617 = vsub.f32 %v584, %v599
    %v618 = vsub.f32 %v585, %v602
    %v619 = vsub.f32 %v586, %v605
    %v620 = vsub.f32 %v587, %v608
    %v621 = vsub.f32 %v588, %v611
    %v622 = vsub.f32 %v589, %v614
    %v623 = vmul.f32 %v615, 1.442695
    %v624 = vpow.pop %v623
    %v625 = vmul.f32 %v616, 1.442695
    %v626 = vpow.pop %v625
    %v627 = vmul.f32 %v617, 1.442695
    %v628 = vpow.pop %v627
    %v629 = vmul.f32 %v618, 1.442695
    %v630 = vpow.pop %v629
    %v631 = vmul.f32 %v619, 1.442695
    %v632 = vpow.pop %v631
    %v633 = vmul.f32 %v620, 1.442695
    %v634 = vpow.pop %v633
    %v635 = vmul.f32 %v621, 1.442695
    %v636 = vpow.pop %v635
    %v637 = vmul.f32 %v622, 1.442695
    %v638 = vpow.pop %v637
    %v639 = vsel %vm590, %v624, 0.0
    %640 = vadd.xlane.f32.xlu0 %v639
    %v641 = vpop.xlane.xlu0 %640
    %v642 = vsel %vm590, %v626, 0.0
    %643 = vadd.xlane.f32.xlu0 %v642
    %v644 = vpop.xlane.xlu0 %643
    %v645 = vsel %vm590, %v628, 0.0
    %646 = vadd.xlane.f32.xlu0 %v645
    %v647 = vpop.xlane.xlu0 %646
    %v648 = vsel %vm590, %v630, 0.0
    %649 = vadd.xlane.f32.xlu0 %v648
    %v650 = vpop.xlane.xlu0 %649
    %v651 = vsel %vm590, %v632, 0.0
    %652 = vadd.xlane.f32.xlu0 %v651
    %v653 = vpop.xlane.xlu0 %652
    %v654 = vsel %vm590, %v634, 0.0
    %655 = vadd.xlane.f32.xlu0 %v654
    %v656 = vpop.xlane.xlu0 %655
    %v657 = vsel %vm590, %v636, 0.0
    %658 = vadd.xlane.f32.xlu0 %v657
    %v659 = vpop.xlane.xlu0 %658
    %v660 = vsel %vm590, %v638, 0.0
    %661 = vadd.xlane.f32.xlu0 %v660
    %v662 = vpop.xlane.xlu0 %661
    %v663 = vrcp.pop %v641
    %v664 = vrcp.pop %v644
    %v665 = vrcp.pop %v647
    %v666 = vrcp.pop %v650
    %v667 = vrcp.pop %v653
    %v668 = vrcp.pop %v656
    %v669 = vrcp.pop %v659
    %v670 = vrcp.pop %v662
    %v671 = vmul.f32 %v624, %v663
    %v672 = vmul.f32 %v626, %v664
    %v673 = vmul.f32 %v628, %v665
    %v674 = vmul.f32 %v630, %v666
    %v675 = vmul.f32 %v632, %v667
    %v676 = vmul.f32 %v634, %v668
    %v677 = vmul.f32 %v636, %v669
    %v678 = vmul.f32 %v638, %v670
    %v679 = vpack.c.bf16 %v671, %v671
    %v680 = vpack.c.bf16 %v672, %v672
    %v681 = vpack.c.bf16 %v673, %v673
    %v682 = vpack.c.bf16 %v674, %v674
    %v683 = vpack.c.bf16 %v675, %v675
    %v684 = vpack.c.bf16 %v676, %v676
    %v685 = vpack.c.bf16 %v677, %v677
    %v686 = vpack.c.bf16 %v678, %v678
    %687 = vrot.lane.b32.xlu0 %v174, 64
    %v688 = vpop.permute.xlu0 %687
    %v690 = vsel %vm590, %v679, 0
    %vm692 = vcmask 1043456
    %v694 = vsel %vm692, %v688, 0
    %696 = vmatprep.subr.bf16.mxu0 0
    %697 = vmatpush1.bf16.msra.mxu0 %v694
    %698 = vmatprep.subr.bf16.mxu0 0
    %699 = vmatpush1.bf16.msra.mxu0 0
    %700 = vmatprep.subr.bf16.mxu0 0
    %701 = vmatpush1.bf16.msra.mxu0 0
    %702 = vmatprep.subr.bf16.mxu0 0
    %703 = vmatpush1.bf16.msra.mxu0 0
    %704 = vmatprep.subr.bf16.mxu0 0
    %705 = vmatpush1.bf16.msra.mxu0 0
    %706 = vmatprep.subr.bf16.mxu0 0
    %707 = vmatpush1.bf16.msra.mxu0 0
    %708 = vmatprep.subr.bf16.mxu0 0
    %709 = vmatpush1.bf16.msra.mxu0 0
    %710 = vmatprep.subr.bf16.mxu0 0
    %711 = vmatpush1.bf16.msra.mxu0 0
    %712 = vmatprep.subr.bf16.mxu0 0
    %713 = vmatpush1.bf16.msra.mxu0 0
    %714 = vmatprep.subr.bf16.mxu0 0
    %715 = vmatpush1.bf16.msra.mxu0 0
    %716 = vmatprep.subr.bf16.mxu0 0
    %717 = vmatpush1.bf16.msra.mxu0 0
    %718 = vmatprep.subr.bf16.mxu0 0
    %719 = vmatpush1.bf16.msra.mxu0 0
    %720 = vmatprep.subr.bf16.mxu0 0
    %721 = vmatpush1.bf16.msra.mxu0 0
    %722 = vmatprep.subr.bf16.mxu0 0
    %723 = vmatpush1.bf16.msra.mxu0 0
    %724 = vmatprep.subr.bf16.mxu0 0
    %725 = vmatpush1.bf16.msra.mxu0 0
    %726 = vmatprep.subr.bf16.mxu0 0
    %727 = vmatpush1.bf16.msra.mxu0 0
    %728 = vmatprep.mubr.bf16.mxu0 0
    %729 = vmatmul.mubr.bf16.gmra.mrb[0].mxu0 %v690
    %v730 = vpop.f32.mrb[0].mxu0
    %v731 = vadd.f32 0.0, %v730
    %v732 = vpop.f32.mrb[0].mxu0
    %v733 = vpop.f32.mrb[0].mxu0
    %v734 = vpop.f32.mrb[0].mxu0
    %735 = vdwg.mxu0
    %736 = vrot.lane.b32.xlu0 %v175, 64
    %v737 = vpop.permute.xlu0 %736
    %v739 = vsel %vm590, %v680, 0
    %v742 = vsel %vm692, %v737, 0
    %744 = vmatprep.subr.bf16.mxu0 0
    %745 = vmatpush1.bf16.msra.mxu0 %v742
    %746 = vmatprep.subr.bf16.mxu0 0
    %747 = vmatpush1.bf16.msra.mxu0 0
    %748 = vmatprep.subr.bf16.mxu0 0
    %749 = vmatpush1.bf16.msra.mxu0 0
    %750 = vmatprep.subr.bf16.mxu0 0
    %751 = vmatpush1.bf16.msra.mxu0 0
    %752 = vmatprep.subr.bf16.mxu0 0
    %753 = vmatpush1.bf16.msra.mxu0 0
    %754 = vmatprep.subr.bf16.mxu0 0
    %755 = vmatpush1.bf16.msra.mxu0 0
    %756 = vmatprep.subr.bf16.mxu0 0
    %757 = vmatpush1.bf16.msra.mxu0 0
    %758 = vmatprep.subr.bf16.mxu0 0
    %759 = vmatpush1.bf16.msra.mxu0 0
    %760 = vmatprep.subr.bf16.mxu0 0
    %761 = vmatpush1.bf16.msra.mxu0 0
    %762 = vmatprep.subr.bf16.mxu0 0
    %763 = vmatpush1.bf16.msra.mxu0 0
    %764 = vmatprep.subr.bf16.mxu0 0
    %765 = vmatpush1.bf16.msra.mxu0 0
    %766 = vmatprep.subr.bf16.mxu0 0
    %767 = vmatpush1.bf16.msra.mxu0 0
    %768 = vmatprep.subr.bf16.mxu0 0
    %769 = vmatpush1.bf16.msra.mxu0 0
    %770 = vmatprep.subr.bf16.mxu0 0
    %771 = vmatpush1.bf16.msra.mxu0 0
    %772 = vmatprep.subr.bf16.mxu0 0
    %773 = vmatpush1.bf16.msra.mxu0 0
    %774 = vmatprep.subr.bf16.mxu0 0
    %775 = vmatpush1.bf16.msra.mxu0 0
    %776 = vmatprep.mubr.bf16.mxu0 0
    %777 = vmatmul.mubr.bf16.gmra.mrb[0].mxu0 %v739
    %v778 = vpop.f32.mrb[0].mxu0
    %v779 = vadd.f32 0.0, %v778
    %v780 = vpop.f32.mrb[0].mxu0
    %v781 = vpop.f32.mrb[0].mxu0
    %v782 = vpop.f32.mrb[0].mxu0
    %783 = vdwg.mxu0
    %784 = vrot.lane.b32.xlu0 %v176, 64
    %v785 = vpop.permute.xlu0 %784
    %v787 = vsel %vm590, %v681, 0
    %v790 = vsel %vm692, %v785, 0
    %792 = vmatprep.subr.bf16.mxu0 0
    %793 = vmatpush1.bf16.msra.mxu0 %v790
    %794 = vmatprep.subr.bf16.mxu0 0
    %795 = vmatpush1.bf16.msra.mxu0 0
    %796 = vmatprep.subr.bf16.mxu0 0
    %797 = vmatpush1.bf16.msra.mxu0 0
    %798 = vmatprep.subr.bf16.mxu0 0
    %799 = vmatpush1.bf16.msra.mxu0 0
    %800 = vmatprep.subr.bf16.mxu0 0
    %801 = vmatpush1.bf16.msra.mxu0 0
    %802 = vmatprep.subr.bf16.mxu0 0
    %803 = vmatpush1.bf16.msra.mxu0 0
    %804 = vmatprep.subr.bf16.mxu0 0
    %805 = vmatpush1.bf16.msra.mxu0 0
    %806 = vmatprep.subr.bf16.mxu0 0
    %807 = vmatpush1.bf16.msra.mxu0 0
    %808 = vmatprep.subr.bf16.mxu0 0
    %809 = vmatpush1.bf16.msra.mxu0 0
    %810 = vmatprep.subr.bf16.mxu0 0
    %811 = vmatpush1.bf16.msra.mxu0 0
    %812 = vmatprep.subr.bf16.mxu0 0
    %813 = vmatpush1.bf16.msra.mxu0 0
    %814 = vmatprep.subr.bf16.mxu0 0
    %815 = vmatpush1.bf16.msra.mxu0 0
    %816 = vmatprep.subr.bf16.mxu0 0
    %817 = vmatpush1.bf16.msra.mxu0 0
    %818 = vmatprep.subr.bf16.mxu0 0
    %819 = vmatpush1.bf16.msra.mxu0 0
    %820 = vmatprep.subr.bf16.mxu0 0
    %821 = vmatpush1.bf16.msra.mxu0 0
    %822 = vmatprep.subr.bf16.mxu0 0
    %823 = vmatpush1.bf16.msra.mxu0 0
    %824 = vmatprep.mubr.bf16.mxu0 0
    %825 = vmatmul.mubr.bf16.gmra.mrb[0].mxu0 %v787
    %v826 = vpop.f32.mrb[0].mxu0
    %v827 = vadd.f32 0.0, %v826
    %v828 = vpop.f32.mrb[0].mxu0
    %v829 = vpop.f32.mrb[0].mxu0
    %v830 = vpop.f32.mrb[0].mxu0
    %831 = vdwg.mxu0
    %832 = vrot.lane.b32.xlu0 %v177, 64
    %v833 = vpop.permute.xlu0 %832
    %v835 = vsel %vm590, %v682, 0
    %v838 = vsel %vm692, %v833, 0
    %840 = vmatprep.subr.bf16.mxu0 0
    %841 = vmatpush1.bf16.msra.mxu0 %v838
    %842 = vmatprep.subr.bf16.mxu0 0
    %843 = vmatpush1.bf16.msra.mxu0 0
    %844 = vmatprep.subr.bf16.mxu0 0
    %845 = vmatpush1.bf16.msra.mxu0 0
    %846 = vmatprep.subr.bf16.mxu0 0
    %847 = vmatpush1.bf16.msra.mxu0 0
    %848 = vmatprep.subr.bf16.mxu0 0
    %849 = vmatpush1.bf16.msra.mxu0 0
    %850 = vmatprep.subr.bf16.mxu0 0
    %851 = vmatpush1.bf16.msra.mxu0 0
    %852 = vmatprep.subr.bf16.mxu0 0
    %853 = vmatpush1.bf16.msra.mxu0 0
    %854 = vmatprep.subr.bf16.mxu0 0
    %855 = vmatpush1.bf16.msra.mxu0 0
    %856 = vmatprep.subr.bf16.mxu0 0
    %857 = vmatpush1.bf16.msra.mxu0 0
    %858 = vmatprep.subr.bf16.mxu0 0
    %859 = vmatpush1.bf16.msra.mxu0 0
    %860 = vmatprep.subr.bf16.mxu0 0
    %861 = vmatpush1.bf16.msra.mxu0 0
    %862 = vmatprep.subr.bf16.mxu0 0
    %863 = vmatpush1.bf16.msra.mxu0 0
    %864 = vmatprep.subr.bf16.mxu0 0
    %865 = vmatpush1.bf16.msra.mxu0 0
    %866 = vmatprep.subr.bf16.mxu0 0
    %867 = vmatpush1.bf16.msra.mxu0 0
    %868 = vmatprep.subr.bf16.mxu0 0
    %869 = vmatpush1.bf16.msra.mxu0 0
    %870 = vmatprep.subr.bf16.mxu0 0
    %871 = vmatpush1.bf16.msra.mxu0 0
    %872 = vmatprep.mubr.bf16.mxu0 0
    %873 = vmatmul.mubr.bf16.gmra.mrb[0].mxu0 %v835
    %v874 = vpop.f32.mrb[0].mxu0
    %v875 = vadd.f32 0.0, %v874
    %v876 = vpop.f32.mrb[0].mxu0
    %v877 = vpop.f32.mrb[0].mxu0
    %v878 = vpop.f32.mrb[0].mxu0
    %879 = vdwg.mxu0
    %880 = vrot.lane.b32.xlu0 %v178, 64
    %v881 = vpop.permute.xlu0 %880
    %v883 = vsel %vm590, %v683, 0
    %v886 = vsel %vm692, %v881, 0
    %888 = vmatprep.subr.bf16.mxu0 0
    %889 = vmatpush1.bf16.msra.mxu0 %v886
    %890 = vmatprep.subr.bf16.mxu0 0
    %891 = vmatpush1.bf16.msra.mxu0 0
    %892 = vmatprep.subr.bf16.mxu0 0
    %893 = vmatpush1.bf16.msra.mxu0 0
    %894 = vmatprep.subr.bf16.mxu0 0
    %895 = vmatpush1.bf16.msra.mxu0 0
    %896 = vmatprep.subr.bf16.mxu0 0
    %897 = vmatpush1.bf16.msra.mxu0 0
    %898 = vmatprep.subr.bf16.mxu0 0
    %899 = vmatpush1.bf16.msra.mxu0 0
    %900 = vmatprep.subr.bf16.mxu0 0
    %901 = vmatpush1.bf16.msra.mxu0 0
    %902 = vmatprep.subr.bf16.mxu0 0
    %903 = vmatpush1.bf16.msra.mxu0 0
    %904 = vmatprep.subr.bf16.mxu0 0
    %905 = vmatpush1.bf16.msra.mxu0 0
    %906 = vmatprep.subr.bf16.mxu0 0
    %907 = vmatpush1.bf16.msra.mxu0 0
    %908 = vmatprep.subr.bf16.mxu0 0
    %909 = vmatpush1.bf16.msra.mxu0 0
    %910 = vmatprep.subr.bf16.mxu0 0
    %911 = vmatpush1.bf16.msra.mxu0 0
    %912 = vmatprep.subr.bf16.mxu0 0
    %913 = vmatpush1.bf16.msra.mxu0 0
    %914 = vmatprep.subr.bf16.mxu0 0
    %915 = vmatpush1.bf16.msra.mxu0 0
    %916 = vmatprep.subr.bf16.mxu0 0
    %917 = vmatpush1.bf16.msra.mxu0 0
    %918 = vmatprep.subr.bf16.mxu0 0
    %919 = vmatpush1.bf16.msra.mxu0 0
    %920 = vmatprep.mubr.bf16.mxu0 0
    %921 = vmatmul.mubr.bf16.gmra.mrb[0].mxu0 %v883
    %v922 = vpop.f32.mrb[0].mxu0
    %v923 = vadd.f32 0.0, %v922
    %v924 = vpop.f32.mrb[0].mxu0
    %v925 = vpop.f32.mrb[0].mxu0
    %v926 = vpop.f32.mrb[0].mxu0
    %927 = vdwg.mxu0
    %928 = vrot.lane.b32.xlu0 %v179, 64
    %v929 = vpop.permute.xlu0 %928
    %v931 = vsel %vm590, %v684, 0
    %v934 = vsel %vm692, %v929, 0
    %936 = vmatprep.subr.bf16.mxu0 0
    %937 = vmatpush1.bf16.msra.mxu0 %v934
    %938 = vmatprep.subr.bf16.mxu0 0
    %939 = vmatpush1.bf16.msra.mxu0 0
    %940 = vmatprep.subr.bf16.mxu0 0
    %941 = vmatpush1.bf16.msra.mxu0 0
    %942 = vmatprep.subr.bf16.mxu0 0
    %943 = vmatpush1.bf16.msra.mxu0 0
    %944 = vmatprep.subr.bf16.mxu0 0
    %945 = vmatpush1.bf16.msra.mxu0 0
    %946 = vmatprep.subr.bf16.mxu0 0
    %947 = vmatpush1.bf16.msra.mxu0 0
    %948 = vmatprep.subr.bf16.mxu0 0
    %949 = vmatpush1.bf16.msra.mxu0 0
    %950 = vmatprep.subr.bf16.mxu0 0
    %951 = vmatpush1.bf16.msra.mxu0 0
    %952 = vmatprep.subr.bf16.mxu0 0
    %953 = vmatpush1.bf16.msra.mxu0 0
    %954 = vmatprep.subr.bf16.mxu0 0
    %955 = vmatpush1.bf16.msra.mxu0 0
    %956 = vmatprep.subr.bf16.mxu0 0
    %957 = vmatpush1.bf16.msra.mxu0 0
    %958 = vmatprep.subr.bf16.mxu0 0
    %959 = vmatpush1.bf16.msra.mxu0 0
    %960 = vmatprep.subr.bf16.mxu0 0
    %961 = vmatpush1.bf16.msra.mxu0 0
    %962 = vmatprep.subr.bf16.mxu0 0
    %963 = vmatpush1.bf16.msra.mxu0 0
    %964 = vmatprep.subr.bf16.mxu0 0
    %965 = vmatpush1.bf16.msra.mxu0 0
    %966 = vmatprep.subr.bf16.mxu0 0
    %967 = vmatpush1.bf16.msra.mxu0 0
    %968 = vmatprep.mubr.bf16.mxu0 0
    %969 = vmatmul.mubr.bf16.gmra.mrb[0].mxu0 %v931
    %v970 = vpop.f32.mrb[0].mxu0
    %v971 = vadd.f32 0.0, %v970
    %v972 = vpop.f32.mrb[0].mxu0
    %v973 = vpop.f32.mrb[0].mxu0
    %v974 = vpop.f32.mrb[0].mxu0
    %975 = vdwg.mxu0
    %976 = vrot.lane.b32.xlu0 %v180, 64
    %v977 = vpop.permute.xlu0 %976
    %v979 = vsel %vm590, %v685, 0
    %v982 = vsel %vm692, %v977, 0
    %984 = vmatprep.subr.bf16.mxu0 0
    %985 = vmatpush1.bf16.msra.mxu0 %v982
    %986 = vmatprep.subr.bf16.mxu0 0
    %987 = vmatpush1.bf16.msra.mxu0 0
    %988 = vmatprep.subr.bf16.mxu0 0
    %989 = vmatpush1.bf16.msra.mxu0 0
    %990 = vmatprep.subr.bf16.mxu0 0
    %991 = vmatpush1.bf16.msra.mxu0 0
    %992 = vmatprep.subr.bf16.mxu0 0
    %993 = vmatpush1.bf16.msra.mxu0 0
    %994 = vmatprep.subr.bf16.mxu0 0
    %995 = vmatpush1.bf16.msra.mxu0 0
    %996 = vmatprep.subr.bf16.mxu0 0
    %997 = vmatpush1.bf16.msra.mxu0 0
    %998 = vmatprep.subr.bf16.mxu0 0
    %999 = vmatpush1.bf16.msra.mxu0 0
    %1000 = vmatprep.subr.bf16.mxu0 0
    %1001 = vmatpush1.bf16.msra.mxu0 0
    %1002 = vmatprep.subr.bf16.mxu0 0
    %1003 = vmatpush1.bf16.msra.mxu0 0
    %1004 = vmatprep.subr.bf16.mxu0 0
    %1005 = vmatpush1.bf16.msra.mxu0 0
    %1006 = vmatprep.subr.bf16.mxu0 0
    %1007 = vmatpush1.bf16.msra.mxu0 0
    %1008 = vmatprep.subr.bf16.mxu0 0
    %1009 = vmatpush1.bf16.msra.mxu0 0
    %1010 = vmatprep.subr.bf16.mxu0 0
    %1011 = vmatpush1.bf16.msra.mxu0 0
    %1012 = vmatprep.subr.bf16.mxu0 0
    %1013 = vmatpush1.bf16.msra.mxu0 0
    %1014 = vmatprep.subr.bf16.mxu0 0
    %1015 = vmatpush1.bf16.msra.mxu0 0
    %1016 = vmatprep.mubr.bf16.mxu0 0
    %1017 = vmatmul.mubr.bf16.gmra.mrb[0].mxu0 %v979
    %v1018 = vpop.f32.mrb[0].mxu0
    %v1019 = vadd.f32 0.0, %v1018
    %v1020 = vpop.f32.mrb[0].mxu0
    %v1021 = vpop.f32.mrb[0].mxu0
    %v1022 = vpop.f32.mrb[0].mxu0
    %1023 = vdwg.mxu0
    %1024 = vrot.lane.b32.xlu0 %v181, 64
    %v1025 = vpop.permute.xlu0 %1024
    %v1027 = vsel %vm590, %v686, 0
    %v1030 = vsel %vm692, %v1025, 0
    %1032 = vmatprep.subr.bf16.mxu0 0
    %1033 = vmatpush1.bf16.msra.mxu0 %v1030
    %1034 = vmatprep.subr.bf16.mxu0 0
    %1035 = vmatpush1.bf16.msra.mxu0 0
    %1036 = vmatprep.subr.bf16.mxu0 0
    %1037 = vmatpush1.bf16.msra.mxu0 0
    %1038 = vmatprep.subr.bf16.mxu0 0
    %1039 = vmatpush1.bf16.msra.mxu0 0
    %1040 = vmatprep.subr.bf16.mxu0 0
    %1041 = vmatpush1.bf16.msra.mxu0 0
    %1042 = vmatprep.subr.bf16.mxu0 0
    %1043 = vmatpush1.bf16.msra.mxu0 0
    %1044 = vmatprep.subr.bf16.mxu0 0
    %1045 = vmatpush1.bf16.msra.mxu0 0
    %1046 = vmatprep.subr.bf16.mxu0 0
    %1047 = vmatpush1.bf16.msra.mxu0 0
    %1048 = vmatprep.subr.bf16.mxu0 0
    %1049 = vmatpush1.bf16.msra.mxu0 0
    %1050 = vmatprep.subr.bf16.mxu0 0
    %1051 = vmatpush1.bf16.msra.mxu0 0
    %1052 = vmatprep.subr.bf16.mxu0 0
    %1053 = vmatpush1.bf16.msra.mxu0 0
    %1054 = vmatprep.subr.bf16.mxu0 0
    %1055 = vmatpush1.bf16.msra.mxu0 0
    %1056 = vmatprep.subr.bf16.mxu0 0
    %1057 = vmatpush1.bf16.msra.mxu0 0
    %1058 = vmatprep.subr.bf16.mxu0 0
    %1059 = vmatpush1.bf16.msra.mxu0 0
    %1060 = vmatprep.subr.bf16.mxu0 0
    %1061 = vmatpush1.bf16.msra.mxu0 0
    %1062 = vmatprep.subr.bf16.mxu0 0
    %1063 = vmatpush1.bf16.msra.mxu0 0
    %1064 = vmatprep.mubr.bf16.mxu0 0
    %1065 = vmatmul.mubr.bf16.gmra.mrb[0].mxu0 %v1027
    %v1066 = vpop.f32.mrb[0].mxu0
    %v1067 = vadd.f32 0.0, %v1066
    %v1068 = vpop.f32.mrb[0].mxu0
    %v1069 = vpop.f32.mrb[0].mxu0
    %v1070 = vpop.f32.mrb[0].mxu0
    %1071 = vdwg.mxu0
    %v1072 = vcombine.low %v731, %v827
    %v1073 = vcombine.high %v731, %v827
    %v1075 = vunpack.c.l.s4 1983009808
    %v1076 = vunpack.c.0.s8 %v1075
    %v1077 = vlaneseq
    %v1078 = vshrl.u32 %v1077, 7
    %v1079 = vsub.s32 %v1076, %v1078
    %v1080 = vrot.slane %v1072, %v1079
    %v1082 = vunpack.c.l.s4 1983009808
    %v1083 = vunpack.c.0.s8 %v1082
    %v1084 = vlaneseq
    %v1085 = vshrl.u32 %v1084, 7
    %v1086 = vsub.s32 %v1083, %v1085
    %v1087 = vrot.slane %v1073, %v1086
    %v1088 = vcombine.low %v779, %v875
    %v1089 = vcombine.high %v779, %v875
    %v1091 = vunpack.c.l.s4 1983009808
    %v1092 = vunpack.c.0.s8 %v1091
    %v1093 = vlaneseq
    %v1094 = vshrl.u32 %v1093, 7
    %v1095 = vsub.s32 %v1092, %v1094
    %v1096 = vrot.slane %v1088, %v1095
    %v1098 = vunpack.c.l.s4 1983009808
    %v1099 = vunpack.c.0.s8 %v1098
    %v1100 = vlaneseq
    %v1101 = vshrl.u32 %v1100, 7
    %v1102 = vsub.s32 %v1099, %v1101
    %v1103 = vrot.slane %v1089, %v1102
    %v1104 = vcombine.low %v923, %v1019
    %v1105 = vcombine.high %v923, %v1019
    %v1107 = vunpack.c.l.s4 1983009808
    %v1108 = vunpack.c.0.s8 %v1107
    %v1109 = vlaneseq
    %v1110 = vshrl.u32 %v1109, 7
    %v1111 = vsub.s32 %v1108, %v1110
    %v1112 = vrot.slane %v1104, %v1111
    %v1114 = vunpack.c.l.s4 1983009808
    %v1115 = vunpack.c.0.s8 %v1114
    %v1116 = vlaneseq
    %v1117 = vshrl.u32 %v1116, 7
    %v1118 = vsub.s32 %v1115, %v1117
    %v1119 = vrot.slane %v1105, %v1118
    %v1120 = vcombine.low %v971, %v1067
    %v1121 = vcombine.high %v971, %v1067
    %v1123 = vunpack.c.l.s4 1983009808
    %v1124 = vunpack.c.0.s8 %v1123
    %v1125 = vlaneseq
    %v1126 = vshrl.u32 %v1125, 7
    %v1127 = vsub.s32 %v1124, %v1126
    %v1128 = vrot.slane %v1120, %v1127
    %v1130 = vunpack.c.l.s4 1983009808
    %v1131 = vunpack.c.0.s8 %v1130
    %v1132 = vlaneseq
    %v1133 = vshrl.u32 %v1132, 7
    %v1134 = vsub.s32 %v1131, %v1133
    %v1135 = vrot.slane %v1121, %v1134
    %v1136 = vcombine.low %v1080, %v1096
    %v1137 = vcombine.high %v1080, %v1096
    %v1139 = vunpack.c.l.s4 1934713408
    %v1140 = vunpack.c.0.s8 %v1139
    %v1141 = vlaneseq
    %v1142 = vshrl.u32 %v1141, 7
    %v1143 = vsub.s32 %v1140, %v1142
    %v1144 = vrot.slane %v1136, %v1143
    %v1146 = vunpack.c.l.s4 1934713408
    %v1147 = vunpack.c.0.s8 %v1146
    %v1148 = vlaneseq
    %v1149 = vshrl.u32 %v1148, 7
    %v1150 = vsub.s32 %v1147, %v1149
    %v1151 = vrot.slane %v1137, %v1150
    %v1152 = vcombine.low %v1087, %v1103
    %v1153 = vcombine.high %v1087, %v1103
    %v1155 = vunpack.c.l.s4 1934713408
    %v1156 = vunpack.c.0.s8 %v1155
    %v1157 = vlaneseq
    %v1158 = vshrl.u32 %v1157, 7
    %v1159 = vsub.s32 %v1156, %v1158
    %v1160 = vrot.slane %v1152, %v1159
    %v1162 = vunpack.c.l.s4 1934713408
    %v1163 = vunpack.c.0.s8 %v1162
    %v1164 = vlaneseq
    %v1165 = vshrl.u32 %v1164, 7
    %v1166 = vsub.s32 %v1163, %v1165
    %v1167 = vrot.slane %v1153, %v1166
    %v1168 = vcombine.low %v1112, %v1128
    %v1169 = vcombine.high %v1112, %v1128
    %v1171 = vunpack.c.l.s4 1934713408
    %v1172 = vunpack.c.0.s8 %v1171
    %v1173 = vlaneseq
    %v1174 = vshrl.u32 %v1173, 7
    %v1175 = vsub.s32 %v1172, %v1174
    %v1176 = vrot.slane %v1168, %v1175
    %v1178 = vunpack.c.l.s4 1934713408
    %v1179 = vunpack.c.0.s8 %v1178
    %v1180 = vlaneseq
    %v1181 = vshrl.u32 %v1180, 7
    %v1182 = vsub.s32 %v1179, %v1181
    %v1183 = vrot.slane %v1169, %v1182
    %v1184 = vcombine.low %v1119, %v1135
    %v1185 = vcombine.high %v1119, %v1135
    %v1187 = vunpack.c.l.s4 1934713408
    %v1188 = vunpack.c.0.s8 %v1187
    %v1189 = vlaneseq
    %v1190 = vshrl.u32 %v1189, 7
    %v1191 = vsub.s32 %v1188, %v1190
    %v1192 = vrot.slane %v1184, %v1191
    %v1194 = vunpack.c.l.s4 1934713408
    %v1195 = vunpack.c.0.s8 %v1194
    %v1196 = vlaneseq
    %v1197 = vshrl.u32 %v1196, 7
    %v1198 = vsub.s32 %v1195, %v1197
    %v1199 = vrot.slane %v1185, %v1198
    %v1200 = vcombine.low %v1144, %v1176
    %v1201 = vcombine.high %v1144, %v1176
    %v1202 = vcombine.low %v1151, %v1183
    %v1203 = vcombine.high %v1151, %v1183
    %v1204 = vcombine.low %v1160, %v1192
    %v1205 = vcombine.high %v1160, %v1192
    %v1206 = vcombine.low %v1167, %v1199
    %v1207 = vcombine.high %v1167, %v1199
    %1209 = vrot.lane.b32.xlu0 %v1201, 32
    %v1210 = vpop.permute.xlu0 %1209
    %1213 = vrot.lane.b32.xlu0 %v1202, 64
    %v1214 = vpop.permute.xlu0 %1213
    %1217 = vrot.lane.b32.xlu0 %v1203, 96
    %v1218 = vpop.permute.xlu0 %1217
    %1221 = vrot.lane.b32.xlu0 %v1205, 32
    %v1222 = vpop.permute.xlu0 %1221
    %1225 = vrot.lane.b32.xlu0 %v1206, 64
    %v1226 = vpop.permute.xlu0 %1225
    %1229 = vrot.lane.b32.xlu0 %v1207, 96
    %v1230 = vpop.permute.xlu0 %1229
    %v1232 = vsel %vm185, %v1200, %v1210
    %vm1233 = vcmask 523264
    %v1234 = vsel %vm1233, %v1232, %v1214
    %vm1235 = vcmask 785408
    %v1236 = vsel %vm1235, %v1234, %v1218
    %v1237 = vsel %vm185, %v1204, %v1222
    %v1238 = vsel %vm1233, %v1237, %v1226
    %v1239 = vsel %vm1235, %v1238, %v1230
    %v1240 = vpack.c.bf16 %v1236, %v1236
    %v1241 = vpack.c.bf16 %v1239, %v1239
    %v1244 = vunpack.c.l.b16 %v1240
    %v1245 = vunpack.c.l.b16 %v1241
    %v1246 = vpack.c.b16 %v1245, %v1244
    %1248 = vst [vmem:[#allocation2] sm:$0xff] %v1246
    // Predicated region
    $region10: #{tpu_custom_call.1} parent=1 // pred_check
      _
    $region11: #{tpu_custom_call.1} parent=1 // pred_check_branch
      %1250 = sbr.rel (0) target = $region13
    $region12: #{tpu_custom_call.1} parent=1 // pred_region
      %s1252 = ssub.s32 128, 128
      %1253 = vsyncadd [#allocation3], %s1252
      %s1255 = sshll.u32 [#allocation2], 4
      %s1256 = int_to_ptr.vmem [resolvable:$true] %s1255
      %1258 = dma.vmem_to_hbm [thread:$0]  %s1256, 128, %s2, [#allocation3]
    $region13: #{tpu_custom_call.1} parent=1 // pred_fallthru
      _
    // Predicated region
    $region14: #{tpu_custom_call.1} parent=1 // pred_check
      _
    $region15: #{tpu_custom_call.1} parent=1 // pred_check_branch
      %1260 = sbr.rel (0) target = $region17
    $region16: #{tpu_custom_call.1} parent=1 // pred_region
      %1261 = dma.done [#allocation3], 128
    $region17: #{tpu_custom_call.1} parent=1 // pred_fallthru
      _
    %1262 = vsyncpa [#allocation3], 1

</llo_original>
